<compile_context>
chip_gen: v6e
topology: v6e:2x2x1
jax: 0.10.0
libtpu: 0.0.40
codegen_flags: <defaults>
</compile_context>

<pallas_src>
import functools

import jax
import jax.numpy as jnp
from jax.experimental import pallas as pl
from jax.experimental.pallas import tpu as pltpu


def _round_up(x, m):
    return (x + m - 1) // m * m


def decoder_kernel(z_ref, w_ref, b_ref, out_ref, *, n_layers, feat):
    # z_ref  : (TB, feat)            bf16  activation tile (batch on sublanes)
    # w_ref  : (n_layers*feat, feat) bf16  packed weights, (in, out) layout per layer
    # b_ref  : (>=n_layers, feat)    f32   packed biases
    # out_ref: (TB, feat)            f32   lane-dense output tile
    x = z_ref[...]                                             # bf16
    for layer in range(n_layers):                              # static unroll (5 layers)
        w = w_ref[layer * feat:(layer + 1) * feat, :]          # static slice of resident slab
        y = jnp.dot(x, w, preferred_element_type=jnp.float32)  # MXU, bf16 in / f32 accum
        y = y + b_ref[layer:layer + 1, :]                      # f32 bias (sublane broadcast)
        if layer < n_layers - 1:
            y = jnp.maximum(y, 0.0)                            # f32 ReLU on VPU
            x = y.astype(jnp.bfloat16)                         # bf16 operand for next MXU pass
        else:
            out_ref[...] = y


def decoder_forward(z, params):
    """params: list of (W, b) pairs for [dec_0, dec_1, dec_2, dec_3, x_bar_layer],
    PyTorch Linear layout: W (out, in), b (out,)."""
    B, n_z = z.shape
    n_layers = len(params)
    n_dim = params[-1][0].shape[0]

    # Pad every feature dim to one lane-dense width (all dims here are <= 128).
    feat_dims = [n_z] + [w.shape[0] for (w, _) in params]
    F = _round_up(max(feat_dims), 128)

    # Pack weights into one (n_layers*F, F) bf16 slab (transposed to (in, out)) and
    # biases into one sublane-padded f32 slab -> only 3 input DMAs for the kernel.
    w_slab = jnp.zeros((n_layers * F, F), jnp.float32)
    b_slab = jnp.zeros((_round_up(n_layers, 8), F), jnp.float32)
    for i, (w, b) in enumerate(params):
        out_f, in_f = w.shape
        w_slab = w_slab.at[i * F:i * F + in_f, :out_f].set(w.T)
        b_slab = b_slab.at[i, :out_f].set(b)
    w_slab = w_slab.astype(jnp.bfloat16)

    # Batch tile: multiple of 16 (bf16 sublane packing), capped at 128.
    TB = min(128, _round_up(B, 16))
    B_pad = _round_up(B, TB)
    z_pad = jnp.zeros((B_pad, F), jnp.bfloat16).at[:B, :n_z].set(z.astype(jnp.bfloat16))

    grid = (B_pad // TB,)
    flops = 2 * B_pad * n_layers * F * F
    bytes_accessed = z_pad.size * 2 + w_slab.size * 2 + b_slab.size * 4 + B_pad * F * 4

    out = pl.pallas_call(
        functools.partial(decoder_kernel, n_layers=n_layers, feat=F),
        out_shape=jax.ShapeDtypeStruct((B_pad, F), jnp.float32),
        grid=grid,
        in_specs=[
            pl.BlockSpec((TB, F), lambda i: (i, 0)),               # activation tile
            pl.BlockSpec((n_layers * F, F), lambda i: (0, 0)),     # weight slab (resident)
            pl.BlockSpec((b_slab.shape[0], F), lambda i: (0, 0)),  # bias slab (resident)
        ],
        out_specs=pl.BlockSpec((TB, F), lambda i: (i, 0)),         # lane-dense output
        compiler_params=pltpu.CompilerParams(dimension_semantics=("parallel",)),
        cost_estimate=pl.CostEstimate(flops=flops, transcendentals=0,
                                      bytes_accessed=bytes_accessed),
    )(z_pad, w_slab, b_slab)

    return out[:B, :n_dim]


def init_params(key, n_dim, dims, n_z):
    """Deterministic synthetic init, PyTorch Linear layout: W (out, in), b (out,)."""
    layer_dims = [
        (n_z, n_z),          # dec_0
        (n_z, dims[2]),      # dec_1
        (dims[2], dims[1]),  # dec_2
        (dims[1], dims[0]),  # dec_3
        (dims[0], n_dim),    # x_bar_layer
    ]
    params = []
    for (fan_in, fan_out) in layer_dims:
        key, kw, kb = jax.random.split(key, 3)
        bound = 1.0 / (fan_in ** 0.5)
        w = jax.random.uniform(kw, (fan_out, fan_in), jnp.float32, -bound, bound)
        b = jax.random.uniform(kb, (fan_out,), jnp.float32, -bound, bound)
        params.append((w, b))
    return params


def reference_forward_f32(z, params):
    x = z
    for i, (w, b) in enumerate(params):
        x = x @ w.T + b
        if i < len(params) - 1:
            x = jnp.maximum(x, 0.0)
    return x


def reference_forward_bf16(z, params):
    # Mirrors the kernel numerics: bf16 MXU operands, f32 accumulate, f32 bias/ReLU.
    x = z.astype(jnp.bfloat16)
    for i, (w, b) in enumerate(params):
        y = jnp.dot(x, w.T.astype(jnp.bfloat16),
                    preferred_element_type=jnp.float32) + b
        if i < len(params) - 1:
            y = jnp.maximum(y, 0.0)
            x = y.astype(jnp.bfloat16)
        else:
            x = y
    return x


if __name__ == "__main__":
    key = jax.random.PRNGKey(0)
    kz, kp = jax.random.split(key)

    # Small shapes consistent with the module.
    batch = 8
    n_z = 32
    dims = [64, 48, 32]   # dims[0], dims[1], dims[2]
    n_dim = 16

    z = jax.random.normal(kz, (batch, n_z), jnp.float32)
    params = init_params(kp, n_dim, dims, n_z)

    out = decoder_forward(z, params)
    out = jax.block_until_ready(out)
    assert out.shape == (batch, n_dim)

    ref_bf16 = reference_forward_bf16(z, params)
    ref_f32 = reference_forward_f32(z, params)
    assert jnp.allclose(out, ref_bf16, atol=1e-3, rtol=1e-3), "mismatch vs bf16-mirrored reference"
    assert jnp.allclose(out, ref_f32, atol=5e-2, rtol=5e-2), "mismatch vs f32 reference"

    print("KERNEL_OK")
</pallas_src>

<mosaic_0001>
module attributes {stable_mosaic.version = 11 : i64} {
  func.func @decoder_kernel(%arg0: i32, %arg1: memref<16x128xbf16, #tpu.memory_space<vmem>>, %arg2: memref<640x128xbf16, #tpu.memory_space<vmem>>, %arg3: memref<8x128xf32, #tpu.memory_space<vmem>>, %arg4: memref<16x128xf32, #tpu.memory_space<vmem>>) attributes {dimension_semantics = [#tpu.dimension_semantics<parallel>], iteration_bounds = array<i64: 1>, scalar_prefetch = 0 : i64, scratch_operands = 0 : i64, tpu.core_type = #tpu.core_type<tc>, window_params = [{transform_indices = @transform_0, window_bounds = array<i64: 16, 128>}, {pipeline_mode = #tpu.pipeline_mode<synchronous>, transform_indices = @transform_1, window_bounds = array<i64: 640, 128>}, {pipeline_mode = #tpu.pipeline_mode<synchronous>, transform_indices = @transform_2, window_bounds = array<i64: 8, 128>}, {transform_indices = @transform_3, window_bounds = array<i64: 16, 128>}]} {
    %c0 = arith.constant 0 : index
    %c0_0 = arith.constant 0 : index
    %0 = vector.load %arg1[%c0, %c0_0] : memref<16x128xbf16, #tpu.memory_space<vmem>>, vector<16x128xbf16>
    %c0_1 = arith.constant 0 : index
    %c0_2 = arith.constant 0 : index
    %1 = vector.load %arg2[%c0_1, %c0_2] : memref<640x128xbf16, #tpu.memory_space<vmem>>, vector<128x128xbf16>
    %cst = arith.constant dense<0.000000e+00> : vector<16x128xf32>
    %2 = tpu.matmul %0, %1, %cst {dimension_numbers = #tpu.dot_dimension_numbers<[1], [0], [0], [1], [0, 0, 1, 1], [], []>} : vector<16x128xbf16>, vector<128x128xbf16>, vector<16x128xf32> -> vector<16x128xf32>
    %c0_3 = arith.constant 0 : index
    %c0_4 = arith.constant 0 : index
    %3 = vector.load %arg3[%c0_3, %c0_4] : memref<8x128xf32, #tpu.memory_space<vmem>>, vector<1x128xf32>
    %4 = vector.broadcast %3 : vector<1x128xf32> to vector<16x128xf32>
    %5 = arith.addf %2, %4 : vector<16x128xf32>
    %cst_5 = arith.constant 0.000000e+00 : f32
    %6 = vector.broadcast %cst_5 : f32 to vector<16x128xf32>
    %7 = arith.maximumf %5, %6 : vector<16x128xf32>
    %8 = arith.truncf %7 : vector<16x128xf32> to vector<16x128xbf16>
    %c128 = arith.constant 128 : index
    %c0_6 = arith.constant 0 : index
    %9 = vector.load %arg2[%c128, %c0_6] : memref<640x128xbf16, #tpu.memory_space<vmem>>, vector<128x128xbf16>
    %cst_7 = arith.constant dense<0.000000e+00> : vector<16x128xf32>
    %10 = tpu.matmul %8, %9, %cst_7 {dimension_numbers = #tpu.dot_dimension_numbers<[1], [0], [0], [1], [0, 0, 1, 1], [], []>} : vector<16x128xbf16>, vector<128x128xbf16>, vector<16x128xf32> -> vector<16x128xf32>
    %c1 = arith.constant 1 : index
    %c0_8 = arith.constant 0 : index
    %11 = vector.load %arg3[%c1, %c0_8] : memref<8x128xf32, #tpu.memory_space<vmem>>, vector<1x128xf32>
    %12 = vector.broadcast %11 : vector<1x128xf32> to vector<16x128xf32>
    %13 = arith.addf %10, %12 : vector<16x128xf32>
    %cst_9 = arith.constant 0.000000e+00 : f32
    %14 = vector.broadcast %cst_9 : f32 to vector<16x128xf32>
    %15 = arith.maximumf %13, %14 : vector<16x128xf32>
    %16 = arith.truncf %15 : vector<16x128xf32> to vector<16x128xbf16>
    %c256 = arith.constant 256 : index
    %c0_10 = arith.constant 0 : index
    %17 = vector.load %arg2[%c256, %c0_10] : memref<640x128xbf16, #tpu.memory_space<vmem>>, vector<128x128xbf16>
    %cst_11 = arith.constant dense<0.000000e+00> : vector<16x128xf32>
    %18 = tpu.matmul %16, %17, %cst_11 {dimension_numbers = #tpu.dot_dimension_numbers<[1], [0], [0], [1], [0, 0, 1, 1], [], []>} : vector<16x128xbf16>, vector<128x128xbf16>, vector<16x128xf32> -> vector<16x128xf32>
    %c2 = arith.constant 2 : index
    %c0_12 = arith.constant 0 : index
    %19 = vector.load %arg3[%c2, %c0_12] : memref<8x128xf32, #tpu.memory_space<vmem>>, vector<1x128xf32>
    %20 = vector.broadcast %19 : vector<1x128xf32> to vector<16x128xf32>
    %21 = arith.addf %18, %20 : vector<16x128xf32>
    %cst_13 = arith.constant 0.000000e+00 : f32
    %22 = vector.broadcast %cst_13 : f32 to vector<16x128xf32>
    %23 = arith.maximumf %21, %22 : vector<16x128xf32>
    %24 = arith.truncf %23 : vector<16x128xf32> to vector<16x128xbf16>
    %c384 = arith.constant 384 : index
    %c0_14 = arith.constant 0 : index
    %25 = vector.load %arg2[%c384, %c0_14] : memref<640x128xbf16, #tpu.memory_space<vmem>>, vector<128x128xbf16>
    %cst_15 = arith.constant dense<0.000000e+00> : vector<16x128xf32>
    %26 = tpu.matmul %24, %25, %cst_15 {dimension_numbers = #tpu.dot_dimension_numbers<[1], [0], [0], [1], [0, 0, 1, 1], [], []>} : vector<16x128xbf16>, vector<128x128xbf16>, vector<16x128xf32> -> vector<16x128xf32>
    %c3 = arith.constant 3 : index
    %c0_16 = arith.constant 0 : index
    %27 = vector.load %arg3[%c3, %c0_16] : memref<8x128xf32, #tpu.memory_space<vmem>>, vector<1x128xf32>
    %28 = vector.broadcast %27 : vector<1x128xf32> to vector<16x128xf32>
    %29 = arith.addf %26, %28 : vector<16x128xf32>
    %cst_17 = arith.constant 0.000000e+00 : f32
    %30 = vector.broadcast %cst_17 : f32 to vector<16x128xf32>
    %31 = arith.maximumf %29, %30 : vector<16x128xf32>
    %32 = arith.truncf %31 : vector<16x128xf32> to vector<16x128xbf16>
    %c512 = arith.constant 512 : index
    %c0_18 = arith.constant 0 : index
    %33 = vector.load %arg2[%c512, %c0_18] : memref<640x128xbf16, #tpu.memory_space<vmem>>, vector<128x128xbf16>
    %cst_19 = arith.constant dense<0.000000e+00> : vector<16x128xf32>
    %34 = tpu.matmul %32, %33, %cst_19 {dimension_numbers = #tpu.dot_dimension_numbers<[1], [0], [0], [1], [0, 0, 1, 1], [], []>} : vector<16x128xbf16>, vector<128x128xbf16>, vector<16x128xf32> -> vector<16x128xf32>
    %c4 = arith.constant 4 : index
    %c0_20 = arith.constant 0 : index
    %35 = vector.load %arg3[%c4, %c0_20] : memref<8x128xf32, #tpu.memory_space<vmem>>, vector<1x128xf32>
    %36 = vector.broadcast %35 : vector<1x128xf32> to vector<16x128xf32>
    %37 = arith.addf %34, %36 : vector<16x128xf32>
    %c0_21 = arith.constant 0 : index
    %c0_22 = arith.constant 0 : index
    %38 = vector.load %arg4[%c0_21, %c0_22] : memref<16x128xf32, #tpu.memory_space<vmem>>, vector<16x128xf32>
    tpu.vector_store %arg4[%c0_21, %c0_22], %37 {strides = array<i32>} : memref<16x128xf32, #tpu.memory_space<vmem>>, vector<16x128xf32>,
    return
  }
  func.func @transform_0(%arg0: i32) -> (i32, i32) {
    %c0_i32 = arith.constant 0 : i32
    %c0_i32_0 = arith.constant 0 : i32
    return %arg0, %c0_i32 : i32, i32
  }
  func.func @transform_1(%arg0: i32) -> (i32, i32) {
    %c0_i32 = arith.constant 0 : i32
    %c0_i32_0 = arith.constant 0 : i32
    %c0_i32_1 = arith.constant 0 : i32
    return %c0_i32, %c0_i32_0 : i32, i32
  }
  func.func @transform_2(%arg0: i32) -> (i32, i32) {
    %c0_i32 = arith.constant 0 : i32
    %c0_i32_0 = arith.constant 0 : i32
    %c0_i32_1 = arith.constant 0 : i32
    return %c0_i32, %c0_i32_0 : i32, i32
  }
  func.func @transform_3(%arg0: i32) -> (i32, i32) {
    %c0_i32 = arith.constant 0 : i32
    %c0_i32_0 = arith.constant 0 : i32
    return %arg0, %c0_i32 : i32, i32
  }
}

</mosaic_0001>

<llo_original>
// kernel: tpu_custom_call.1
$region0: #{tpu_custom_call.1}
  #allocation0 [shape = 'u32[]', space=smem, size = 0x4, offset = 0x4, fixed_abs, tag = 'smem constant byte address 0x4 - core index']
  #allocation1 [shape = 'u32[144,128]{1,0:T(1,128)}', space=vmem, size = 0x12000, scoped, tag = 'internal scratch']
  %s0 = inlined_call_operand.hbm [shape: bf16[16,128], index: 0, kind: input, shape index: {}]
  %s1 = inlined_call_operand.hbm [shape: bf16[640,128], index: 1, kind: input, shape index: {}]
  %s2 = inlined_call_operand.hbm [shape: f32[8,128], index: 2, kind: input, shape index: {}]
  %s3 = inlined_call_operand.hbm [shape: f32[16,128], index: 3, kind: output, shape index: {}]
  %s4 = sld [smem:[#allocation0]]
  $region34: #{tpu_custom_call.1} parent=0
    _
  %s6 = ssub.s32 1, %s4
  %s7 = scalar_select 0, %s6, %s4
  $region1: #{tpu_custom_call.1} parent=0
    #allocation2 [shape = 'u8[4096]{0}', space=vmem, size = 0x1000, scoped, tag = 'input window, operand 0, single buffered']
    #allocation3 [shape = 's32[1]{0}', space=sflag, size = 0x4, scoped, tag = 'scoped memory for tpu_custom_call.1']
    #allocation4 [shape = 's32[1]{0}', space=sflag, size = 0x4, scoped, tag = 'scoped memory for tpu_custom_call.1']
    #allocation5 [shape = 'u8[163840]{0}', space=vmem, size = 0x28000, scoped, tag = 'input window, operand 1, single buffered']
    #allocation6 [shape = 's32[1]{0}', space=sflag, size = 0x4, scoped, tag = 'scoped memory for tpu_custom_call.1']
    #allocation7 [shape = 'u8[4096]{0}', space=vmem, size = 0x1000, scoped, tag = 'input window, operand 2, single buffered']
    #allocation8 [shape = 'u8[8192]{0}', space=vmem, size = 0x2000, scoped, tag = 'output window, operand 0, single buffered']
    %8 = vsyncpa [#allocation3], 0
    %9 = vsyncpa [#allocation6], 0
    %10 = vsyncpa [#allocation4], 0
    // Predicated region
    $region2: #{tpu_custom_call.1} parent=1 // pred_check
      _
    $region3: #{tpu_custom_call.1} parent=1 // pred_check_branch
      %12 = sbr.rel (0) target = $region5
    $region4: #{tpu_custom_call.1} parent=1 // pred_region
      %s14 = ssub.s32 128, 128
      %15 = vsyncadd [#allocation3], %s14
      %s16 = sshll.u32 [#allocation2], 4
      %s17 = int_to_ptr.vmem [resolvable:$true] %s16
      %22 = dma.hbm_to_vmem [thread:$0]  %s0, 128, %s17, [#allocation3], 64, 64, 4
    $region5: #{tpu_custom_call.1} parent=1 // pred_fallthru
      _
    // Predicated region
    $region6: #{tpu_custom_call.1} parent=1 // pred_check
      _
    $region7: #{tpu_custom_call.1} parent=1 // pred_check_branch
      %24 = sbr.rel (0) target = $region9
    $region8: #{tpu_custom_call.1} parent=1 // pred_region
      %s26 = ssub.s32 5120, 5120
      %27 = vsyncadd [#allocation6], %s26
      %s28 = sshll.u32 [#allocation5], 4
      %s29 = int_to_ptr.vmem [resolvable:$true] %s28
      %34 = dma.hbm_to_vmem [thread:$0]  %s1, 5120, %s29, [#allocation6], 64, 64, 4
    $region9: #{tpu_custom_call.1} parent=1 // pred_fallthru
      _
    // Predicated region
    $region10: #{tpu_custom_call.1} parent=1 // pred_check
      _
    $region11: #{tpu_custom_call.1} parent=1 // pred_check_branch
      %36 = sbr.rel (0) target = $region13
    $region12: #{tpu_custom_call.1} parent=1 // pred_region
      %s38 = ssub.s32 128, 128
      %39 = vsyncadd [#allocation6], %s38
      %s41 = sshll.u32 [#allocation7], 4
      %s42 = int_to_ptr.vmem [resolvable:$true] %s41
      %44 = dma.hbm_to_vmem [thread:$0]  %s2, 128, %s42, [#allocation6]
    $region13: #{tpu_custom_call.1} parent=1 // pred_fallthru
      _
    // Predicated region
    $region14: #{tpu_custom_call.1} parent=1 // pred_check
      _
    $region15: #{tpu_custom_call.1} parent=1 // pred_check_branch
      %46 = sbr.rel (0) target = $region17
    $region16: #{tpu_custom_call.1} parent=1 // pred_region
      %47 = dma.done [#allocation3], 128
    $region17: #{tpu_custom_call.1} parent=1 // pred_fallthru
      _
    // Predicated region
    $region18: #{tpu_custom_call.1} parent=1 // pred_check
      _
    $region19: #{tpu_custom_call.1} parent=1 // pred_check_branch
      %49 = sbr.rel (0) target = $region21
    $region20: #{tpu_custom_call.1} parent=1 // pred_region
      %50 = dma.done [#allocation6], 5120
    $region21: #{tpu_custom_call.1} parent=1 // pred_fallthru
      _
    // Predicated region
    $region22: #{tpu_custom_call.1} parent=1 // pred_check
      _
    $region23: #{tpu_custom_call.1} parent=1 // pred_check_branch
      %52 = sbr.rel (0) target = $region25
    $region24: #{tpu_custom_call.1} parent=1 // pred_region
      %53 = dma.done [#allocation6], 128
    $region25: #{tpu_custom_call.1} parent=1 // pred_fallthru
      _
    %v55 = vld [vmem:[#allocation2] sm:$0xf]
    %v56 = vld [vmem:[#allocation2 + $0x4] sm:$0xf]
    %v57 = vld [vmem:[#allocation5] sm:$0xf]
    %v58 = vld [vmem:[#allocation5 + $0x4] sm:$0xf]
    %v59 = vld [vmem:[#allocation5 + $0x8] sm:$0xf]
    %v60 = vld [vmem:[#allocation5 + $0xc] sm:$0xf]
    %v61 = vld [vmem:[#allocation5 + $0x10] sm:$0xf]
    %v62 = vld [vmem:[#allocation5 + $0x14] sm:$0xf]
    %v63 = vld [vmem:[#allocation5 + $0x18] sm:$0xf]
    %v64 = vld [vmem:[#allocation5 + $0x1c] sm:$0xf]
    %v65 = vld [vmem:[#allocation5 + $0x20] sm:$0xf]
    %v66 = vld [vmem:[#allocation5 + $0x24] sm:$0xf]
    %v67 = vld [vmem:[#allocation5 + $0x28] sm:$0xf]
    %v68 = vld [vmem:[#allocation5 + $0x2c] sm:$0xf]
    %v69 = vld [vmem:[#allocation5 + $0x30] sm:$0xf]
    %v70 = vld [vmem:[#allocation5 + $0x34] sm:$0xf]
    %v71 = vld [vmem:[#allocation5 + $0x38] sm:$0xf]
    %v72 = vld [vmem:[#allocation5 + $0x3c] sm:$0xf]
    %v73 = vld [vmem:[#allocation7] sm:$0x1]
    %v74 = vlaneseq
    %v75 = vshrl.u32 %v74, 7
    %v76 = vsub.s32 0, %v75
    %v77 = vrot.slane %v73, %v76
    %v80 = vunpack.c.l.b16 %v55
    %v81 = vunpack.c.l.b16 %v56
    %v82 = vpack.c.b16 %v81, %v80
    %v100 = vunpack.c.l.b16 %v57
    %v101 = vunpack.c.l.b16 %v58
    %v102 = vunpack.c.l.b16 %v59
    %v103 = vunpack.c.l.b16 %v60
    %v104 = vunpack.c.l.b16 %v61
    %v105 = vunpack.c.l.b16 %v62
    %v106 = vunpack.c.l.b16 %v63
    %v107 = vunpack.c.l.b16 %v64
    %v108 = vunpack.c.l.b16 %v65
    %v109 = vunpack.c.l.b16 %v66
    %v110 = vunpack.c.l.b16 %v67
    %v111 = vunpack.c.l.b16 %v68
    %v112 = vunpack.c.l.b16 %v69
    %v113 = vunpack.c.l.b16 %v70
    %v114 = vunpack.c.l.b16 %v71
    %v115 = vunpack.c.l.b16 %v72
    %v116 = vpack.c.b16 %v101, %v100
    %v117 = vpack.c.b16 %v103, %v102
    %v118 = vpack.c.b16 %v105, %v104
    %v119 = vpack.c.b16 %v107, %v106
    %v120 = vpack.c.b16 %v109, %v108
    %v121 = vpack.c.b16 %v111, %v110
    %v122 = vpack.c.b16 %v113, %v112
    %v123 = vpack.c.b16 %v115, %v114
    %132 = vmatprep.subr.bf16.mxu0 0
    %133 = vmatpush1.bf16.msra.mxu0 %v123
    %134 = vmatprep.subr.bf16.mxu0 0
    %135 = vmatpush1.bf16.msra.mxu0 %v122
    %136 = vmatprep.subr.bf16.mxu0 0
    %137 = vmatpush1.bf16.msra.mxu0 %v121
    %138 = vmatprep.subr.bf16.mxu0 0
    %139 = vmatpush1.bf16.msra.mxu0 %v120
    %140 = vmatprep.subr.bf16.mxu0 0
    %141 = vmatpush1.bf16.msra.mxu0 %v119
    %142 = vmatprep.subr.bf16.mxu0 0
    %143 = vmatpush1.bf16.msra.mxu0 %v118
    %144 = vmatprep.subr.bf16.mxu0 0
    %145 = vmatpush1.bf16.msra.mxu0 %v117
    %146 = vmatprep.subr.bf16.mxu0 0
    %147 = vmatpush1.bf16.msra.mxu0 %v116
    %148 = vmatprep.subr.bf16.mxu0 0
    %149 = vmatpush2.bf16.msra.mxu0 0
    %150 = vmatprep.subr.bf16.mxu0 0
    %151 = vmatpush2.bf16.msra.mxu0 0
    %152 = vmatprep.subr.bf16.mxu0 0
    %153 = vmatpush2.bf16.msra.mxu0 0
    %154 = vmatprep.subr.bf16.mxu0 0
    %155 = vmatpush2.bf16.msra.mxu0 0
    %156 = vmatprep.subr.bf16.mxu0 0
    %157 = vmatpush2.bf16.msra.mxu0 0
    %158 = vmatprep.subr.bf16.mxu0 0
    %159 = vmatpush2.bf16.msra.mxu0 0
    %160 = vmatprep.subr.bf16.mxu0 0
    %161 = vmatpush2.bf16.msra.mxu0 0
    %162 = vmatprep.subr.bf16.mxu0 0
    %163 = vmatpush2.bf16.msra.mxu0 0
    %164 = vmatprep.mubr.bf16.mxu0 0
    %165 = vmatmul.mubr.bf16.gmra.mxu0 %v82
    %v166 = vpop.f32.mrf.mxu0
    %v167 = vadd.f32 %v77, %v166
    %v168 = vpop.f32.mrf.mxu0
    %v169 = vpop.f32.mrf.mxu0
    %v170 = vadd.f32 %v77, %v169
    %v171 = vpop.f32.mrf.mxu0
    %172 = vdwg.mxu0
    %v173 = vmax.f32 %v167, 0.0
    %v174 = vmax.f32 %v170, 0.0
    %v175 = vpack.c.bf16 %v174, %v173
    %v176 = vld [vmem:[#allocation5 + $0x40] sm:$0xf]
    %v177 = vld [vmem:[#allocation5 + $0x44] sm:$0xf]
    %v178 = vld [vmem:[#allocation5 + $0x48] sm:$0xf]
    %v179 = vld [vmem:[#allocation5 + $0x4c] sm:$0xf]
    %v180 = vld [vmem:[#allocation5 + $0x50] sm:$0xf]
    %v181 = vld [vmem:[#allocation5 + $0x54] sm:$0xf]
    %v182 = vld [vmem:[#allocation5 + $0x58] sm:$0xf]
    %v183 = vld [vmem:[#allocation5 + $0x5c] sm:$0xf]
    %v184 = vld [vmem:[#allocation5 + $0x60] sm:$0xf]
    %v185 = vld [vmem:[#allocation5 + $0x64] sm:$0xf]
    %v186 = vld [vmem:[#allocation5 + $0x68] sm:$0xf]
    %v187 = vld [vmem:[#allocation5 + $0x6c] sm:$0xf]
    %v188 = vld [vmem:[#allocation5 + $0x70] sm:$0xf]
    %v189 = vld [vmem:[#allocation5 + $0x74] sm:$0xf]
    %v190 = vld [vmem:[#allocation5 + $0x78] sm:$0xf]
    %v191 = vld [vmem:[#allocation5 + $0x7c] sm:$0xf]
    %v192 = vld [vmem:[#allocation7 + $0x1] sm:$0x1]
    %v193 = vlaneseq
    %v194 = vshrl.u32 %v193, 7
    %v195 = vsub.s32 0, %v194
    %v196 = vrot.slane %v192, %v195
    %v213 = vunpack.c.l.b16 %v176
    %v214 = vunpack.c.l.b16 %v177
    %v215 = vunpack.c.l.b16 %v178
    %v216 = vunpack.c.l.b16 %v179
    %v217 = vunpack.c.l.b16 %v180
    %v218 = vunpack.c.l.b16 %v181
    %v219 = vunpack.c.l.b16 %v182
    %v220 = vunpack.c.l.b16 %v183
    %v221 = vunpack.c.l.b16 %v184
    %v222 = vunpack.c.l.b16 %v185
    %v223 = vunpack.c.l.b16 %v186
    %v224 = vunpack.c.l.b16 %v187
    %v225 = vunpack.c.l.b16 %v188
    %v226 = vunpack.c.l.b16 %v189
    %v227 = vunpack.c.l.b16 %v190
    %v228 = vunpack.c.l.b16 %v191
    %v229 = vpack.c.b16 %v214, %v213
    %v230 = vpack.c.b16 %v216, %v215
    %v231 = vpack.c.b16 %v218, %v217
    %v232 = vpack.c.b16 %v220, %v219
    %v233 = vpack.c.b16 %v222, %v221
    %v234 = vpack.c.b16 %v224, %v223
    %v235 = vpack.c.b16 %v226, %v225
    %v236 = vpack.c.b16 %v228, %v227
    %245 = vmatprep.subr.bf16.mxu0 0
    %246 = vmatpush1.bf16.msra.mxu0 %v236
    %247 = vmatprep.subr.bf16.mxu0 0
    %248 = vmatpush1.bf16.msra.mxu0 %v235
    %249 = vmatprep.subr.bf16.mxu0 0
    %250 = vmatpush1.bf16.msra.mxu0 %v234
    %251 = vmatprep.subr.bf16.mxu0 0
    %252 = vmatpush1.bf16.msra.mxu0 %v233
    %253 = vmatprep.subr.bf16.mxu0 0
    %254 = vmatpush1.bf16.msra.mxu0 %v232
    %255 = vmatprep.subr.bf16.mxu0 0
    %256 = vmatpush1.bf16.msra.mxu0 %v231
    %257 = vmatprep.subr.bf16.mxu0 0
    %258 = vmatpush1.bf16.msra.mxu0 %v230
    %259 = vmatprep.subr.bf16.mxu0 0
    %260 = vmatpush1.bf16.msra.mxu0 %v229
    %261 = vmatprep.subr.bf16.mxu0 0
    %262 = vmatpush2.bf16.msra.mxu0 0
    %263 = vmatprep.subr.bf16.mxu0 0
    %264 = vmatpush2.bf16.msra.mxu0 0
    %265 = vmatprep.subr.bf16.mxu0 0
    %266 = vmatpush2.bf16.msra.mxu0 0
    %267 = vmatprep.subr.bf16.mxu0 0
    %268 = vmatpush2.bf16.msra.mxu0 0
    %269 = vmatprep.subr.bf16.mxu0 0
    %270 = vmatpush2.bf16.msra.mxu0 0
    %271 = vmatprep.subr.bf16.mxu0 0
    %272 = vmatpush2.bf16.msra.mxu0 0
    %273 = vmatprep.subr.bf16.mxu0 0
    %274 = vmatpush2.bf16.msra.mxu0 0
    %275 = vmatprep.subr.bf16.mxu0 0
    %276 = vmatpush2.bf16.msra.mxu0 0
    %277 = vmatprep.mubr.bf16.mxu0 0
    %278 = vmatmul.mubr.bf16.gmra.mxu0 %v175
    %v279 = vpop.f32.mrf.mxu0
    %v280 = vadd.f32 %v196, %v279
    %v281 = vpop.f32.mrf.mxu0
    %v282 = vpop.f32.mrf.mxu0
    %v283 = vadd.f32 %v196, %v282
    %v284 = vpop.f32.mrf.mxu0
    %285 = vdwg.mxu0
    %v286 = vmax.f32 %v280, 0.0
    %v287 = vmax.f32 %v283, 0.0
    %v288 = vpack.c.bf16 %v287, %v286
    %v289 = vld [vmem:[#allocation5 + $0x80] sm:$0xf]
    %v290 = vld [vmem:[#allocation5 + $0x84] sm:$0xf]
    %v291 = vld [vmem:[#allocation5 + $0x88] sm:$0xf]
    %v292 = vld [vmem:[#allocation5 + $0x8c] sm:$0xf]
    %v293 = vld [vmem:[#allocation5 + $0x90] sm:$0xf]
    %v294 = vld [vmem:[#allocation5 + $0x94] sm:$0xf]
    %v295 = vld [vmem:[#allocation5 + $0x98] sm:$0xf]
    %v296 = vld [vmem:[#allocation5 + $0x9c] sm:$0xf]
    %v297 = vld [vmem:[#allocation5 + $0xa0] sm:$0xf]
    %v298 = vld [vmem:[#allocation5 + $0xa4] sm:$0xf]
    %v299 = vld [vmem:[#allocation5 + $0xa8] sm:$0xf]
    %v300 = vld [vmem:[#allocation5 + $0xac] sm:$0xf]
    %v301 = vld [vmem:[#allocation5 + $0xb0] sm:$0xf]
    %v302 = vld [vmem:[#allocation5 + $0xb4] sm:$0xf]
    %v303 = vld [vmem:[#allocation5 + $0xb8] sm:$0xf]
    %v304 = vld [vmem:[#allocation5 + $0xbc] sm:$0xf]
    %v305 = vld [vmem:[#allocation7 + $0x2] sm:$0x1]
    %v306 = vlaneseq
    %v307 = vshrl.u32 %v306, 7
    %v308 = vsub.s32 0, %v307
    %v309 = vrot.slane %v305, %v308
    %v326 = vunpack.c.l.b16 %v289
    %v327 = vunpack.c.l.b16 %v290
    %v328 = vunpack.c.l.b16 %v291
    %v329 = vunpack.c.l.b16 %v292
    %v330 = vunpack.c.l.b16 %v293
    %v331 = vunpack.c.l.b16 %v294
    %v332 = vunpack.c.l.b16 %v295
    %v333 = vunpack.c.l.b16 %v296
    %v334 = vunpack.c.l.b16 %v297
    %v335 = vunpack.c.l.b16 %v298
    %v336 = vunpack.c.l.b16 %v299
    %v337 = vunpack.c.l.b16 %v300
    %v338 = vunpack.c.l.b16 %v301
    %v339 = vunpack.c.l.b16 %v302
    %v340 = vunpack.c.l.b16 %v303
    %v341 = vunpack.c.l.b16 %v304
    %v342 = vpack.c.b16 %v327, %v326
    %v343 = vpack.c.b16 %v329, %v328
    %v344 = vpack.c.b16 %v331, %v330
    %v345 = vpack.c.b16 %v333, %v332
    %v346 = vpack.c.b16 %v335, %v334
    %v347 = vpack.c.b16 %v337, %v336
    %v348 = vpack.c.b16 %v339, %v338
    %v349 = vpack.c.b16 %v341, %v340
    %358 = vmatprep.subr.bf16.mxu0 0
    %359 = vmatpush1.bf16.msra.mxu0 %v349
    %360 = vmatprep.subr.bf16.mxu0 0
    %361 = vmatpush1.bf16.msra.mxu0 %v348
    %362 = vmatprep.subr.bf16.mxu0 0
    %363 = vmatpush1.bf16.msra.mxu0 %v347
    %364 = vmatprep.subr.bf16.mxu0 0
    %365 = vmatpush1.bf16.msra.mxu0 %v346
    %366 = vmatprep.subr.bf16.mxu0 0
    %367 = vmatpush1.bf16.msra.mxu0 %v345
    %368 = vmatprep.subr.bf16.mxu0 0
    %369 = vmatpush1.bf16.msra.mxu0 %v344
    %370 = vmatprep.subr.bf16.mxu0 0
    %371 = vmatpush1.bf16.msra.mxu0 %v343
    %372 = vmatprep.subr.bf16.mxu0 0
    %373 = vmatpush1.bf16.msra.mxu0 %v342
    %374 = vmatprep.subr.bf16.mxu0 0
    %375 = vmatpush2.bf16.msra.mxu0 0
    %376 = vmatprep.subr.bf16.mxu0 0
    %377 = vmatpush2.bf16.msra.mxu0 0
    %378 = vmatprep.subr.bf16.mxu0 0
    %379 = vmatpush2.bf16.msra.mxu0 0
    %380 = vmatprep.subr.bf16.mxu0 0
    %381 = vmatpush2.bf16.msra.mxu0 0
    %382 = vmatprep.subr.bf16.mxu0 0
    %383 = vmatpush2.bf16.msra.mxu0 0
    %384 = vmatprep.subr.bf16.mxu0 0
    %385 = vmatpush2.bf16.msra.mxu0 0
    %386 = vmatprep.subr.bf16.mxu0 0
    %387 = vmatpush2.bf16.msra.mxu0 0
    %388 = vmatprep.subr.bf16.mxu0 0
    %389 = vmatpush2.bf16.msra.mxu0 0
    %390 = vmatprep.mubr.bf16.mxu0 0
    %391 = vmatmul.mubr.bf16.gmra.mxu0 %v288
    %v392 = vpop.f32.mrf.mxu0
    %v393 = vadd.f32 %v309, %v392
    %v394 = vpop.f32.mrf.mxu0
    %v395 = vpop.f32.mrf.mxu0
    %v396 = vadd.f32 %v309, %v395
    %v397 = vpop.f32.mrf.mxu0
    %398 = vdwg.mxu0
    %v399 = vmax.f32 %v393, 0.0
    %v400 = vmax.f32 %v396, 0.0
    %v401 = vpack.c.bf16 %v400, %v399
    %v402 = vld [vmem:[#allocation5 + $0xc0] sm:$0xf]
    %v403 = vld [vmem:[#allocation5 + $0xc4] sm:$0xf]
    %v404 = vld [vmem:[#allocation5 + $0xc8] sm:$0xf]
    %v405 = vld [vmem:[#allocation5 + $0xcc] sm:$0xf]
    %v406 = vld [vmem:[#allocation5 + $0xd0] sm:$0xf]
    %v407 = vld [vmem:[#allocation5 + $0xd4] sm:$0xf]
    %v408 = vld [vmem:[#allocation5 + $0xd8] sm:$0xf]
    %v409 = vld [vmem:[#allocation5 + $0xdc] sm:$0xf]
    %v410 = vld [vmem:[#allocation5 + $0xe0] sm:$0xf]
    %v411 = vld [vmem:[#allocation5 + $0xe4] sm:$0xf]
    %v412 = vld [vmem:[#allocation5 + $0xe8] sm:$0xf]
    %v413 = vld [vmem:[#allocation5 + $0xec] sm:$0xf]
    %v414 = vld [vmem:[#allocation5 + $0xf0] sm:$0xf]
    %v415 = vld [vmem:[#allocation5 + $0xf4] sm:$0xf]
    %v416 = vld [vmem:[#allocation5 + $0xf8] sm:$0xf]
    %v417 = vld [vmem:[#allocation5 + $0xfc] sm:$0xf]
    %v418 = vld [vmem:[#allocation7 + $0x3] sm:$0x1]
    %v419 = vlaneseq
    %v420 = vshrl.u32 %v419, 7
    %v421 = vsub.s32 0, %v420
    %v422 = vrot.slane %v418, %v421
    %v439 = vunpack.c.l.b16 %v402
    %v440 = vunpack.c.l.b16 %v403
    %v441 = vunpack.c.l.b16 %v404
    %v442 = vunpack.c.l.b16 %v405
    %v443 = vunpack.c.l.b16 %v406
    %v444 = vunpack.c.l.b16 %v407
    %v445 = vunpack.c.l.b16 %v408
    %v446 = vunpack.c.l.b16 %v409
    %v447 = vunpack.c.l.b16 %v410
    %v448 = vunpack.c.l.b16 %v411
    %v449 = vunpack.c.l.b16 %v412
    %v450 = vunpack.c.l.b16 %v413
    %v451 = vunpack.c.l.b16 %v414
    %v452 = vunpack.c.l.b16 %v415
    %v453 = vunpack.c.l.b16 %v416
    %v454 = vunpack.c.l.b16 %v417
    %v455 = vpack.c.b16 %v440, %v439
    %v456 = vpack.c.b16 %v442, %v441
    %v457 = vpack.c.b16 %v444, %v443
    %v458 = vpack.c.b16 %v446, %v445
    %v459 = vpack.c.b16 %v448, %v447
    %v460 = vpack.c.b16 %v450, %v449
    %v461 = vpack.c.b16 %v452, %v451
    %v462 = vpack.c.b16 %v454, %v453
    %471 = vmatprep.subr.bf16.mxu0 0
    %472 = vmatpush1.bf16.msra.mxu0 %v462
    %473 = vmatprep.subr.bf16.mxu0 0
    %474 = vmatpush1.bf16.msra.mxu0 %v461
    %475 = vmatprep.subr.bf16.mxu0 0
    %476 = vmatpush1.bf16.msra.mxu0 %v460
    %477 = vmatprep.subr.bf16.mxu0 0
    %478 = vmatpush1.bf16.msra.mxu0 %v459
    %479 = vmatprep.subr.bf16.mxu0 0
    %480 = vmatpush1.bf16.msra.mxu0 %v458
    %481 = vmatprep.subr.bf16.mxu0 0
    %482 = vmatpush1.bf16.msra.mxu0 %v457
    %483 = vmatprep.subr.bf16.mxu0 0
    %484 = vmatpush1.bf16.msra.mxu0 %v456
    %485 = vmatprep.subr.bf16.mxu0 0
    %486 = vmatpush1.bf16.msra.mxu0 %v455
    %487 = vmatprep.subr.bf16.mxu0 0
    %488 = vmatpush2.bf16.msra.mxu0 0
    %489 = vmatprep.subr.bf16.mxu0 0
    %490 = vmatpush2.bf16.msra.mxu0 0
    %491 = vmatprep.subr.bf16.mxu0 0
    %492 = vmatpush2.bf16.msra.mxu0 0
    %493 = vmatprep.subr.bf16.mxu0 0
    %494 = vmatpush2.bf16.msra.mxu0 0
    %495 = vmatprep.subr.bf16.mxu0 0
    %496 = vmatpush2.bf16.msra.mxu0 0
    %497 = vmatprep.subr.bf16.mxu0 0
    %498 = vmatpush2.bf16.msra.mxu0 0
    %499 = vmatprep.subr.bf16.mxu0 0
    %500 = vmatpush2.bf16.msra.mxu0 0
    %501 = vmatprep.subr.bf16.mxu0 0
    %502 = vmatpush2.bf16.msra.mxu0 0
    %503 = vmatprep.mubr.bf16.mxu0 0
    %504 = vmatmul.mubr.bf16.gmra.mxu0 %v401
    %v505 = vpop.f32.mrf.mxu0
    %v506 = vadd.f32 %v422, %v505
    %v507 = vpop.f32.mrf.mxu0
    %v508 = vpop.f32.mrf.mxu0
    %v509 = vadd.f32 %v422, %v508
    %v510 = vpop.f32.mrf.mxu0
    %511 = vdwg.mxu0
    %v512 = vmax.f32 %v506, 0.0
    %v513 = vmax.f32 %v509, 0.0
    %v514 = vpack.c.bf16 %v513, %v512
    %v515 = vld [vmem:[#allocation5 + $0x100] sm:$0xf]
    %v516 = vld [vmem:[#allocation5 + $0x104] sm:$0xf]
    %v517 = vld [vmem:[#allocation5 + $0x108] sm:$0xf]
    %v518 = vld [vmem:[#allocation5 + $0x10c] sm:$0xf]
    %v519 = vld [vmem:[#allocation5 + $0x110] sm:$0xf]
    %v520 = vld [vmem:[#allocation5 + $0x114] sm:$0xf]
    %v521 = vld [vmem:[#allocation5 + $0x118] sm:$0xf]
    %v522 = vld [vmem:[#allocation5 + $0x11c] sm:$0xf]
    %v523 = vld [vmem:[#allocation5 + $0x120] sm:$0xf]
    %v524 = vld [vmem:[#allocation5 + $0x124] sm:$0xf]
    %v525 = vld [vmem:[#allocation5 + $0x128] sm:$0xf]
    %v526 = vld [vmem:[#allocation5 + $0x12c] sm:$0xf]
    %v527 = vld [vmem:[#allocation5 + $0x130] sm:$0xf]
    %v528 = vld [vmem:[#allocation5 + $0x134] sm:$0xf]
    %v529 = vld [vmem:[#allocation5 + $0x138] sm:$0xf]
    %v530 = vld [vmem:[#allocation5 + $0x13c] sm:$0xf]
    %v531 = vld [vmem:[#allocation7 + $0x4] sm:$0x1]
    %v532 = vlaneseq
    %v533 = vshrl.u32 %v532, 7
    %v534 = vsub.s32 0, %v533
    %v535 = vrot.slane %v531, %v534
    %v552 = vunpack.c.l.b16 %v515
    %v553 = vunpack.c.l.b16 %v516
    %v554 = vunpack.c.l.b16 %v517
    %v555 = vunpack.c.l.b16 %v518
    %v556 = vunpack.c.l.b16 %v519
    %v557 = vunpack.c.l.b16 %v520
    %v558 = vunpack.c.l.b16 %v521
    %v559 = vunpack.c.l.b16 %v522
    %v560 = vunpack.c.l.b16 %v523
    %v561 = vunpack.c.l.b16 %v524
    %v562 = vunpack.c.l.b16 %v525
    %v563 = vunpack.c.l.b16 %v526
    %v564 = vunpack.c.l.b16 %v527
    %v565 = vunpack.c.l.b16 %v528
    %v566 = vunpack.c.l.b16 %v529
    %v567 = vunpack.c.l.b16 %v530
    %v568 = vpack.c.b16 %v553, %v552
    %v569 = vpack.c.b16 %v555, %v554
    %v570 = vpack.c.b16 %v557, %v556
    %v571 = vpack.c.b16 %v559, %v558
    %v572 = vpack.c.b16 %v561, %v560
    %v573 = vpack.c.b16 %v563, %v562
    %v574 = vpack.c.b16 %v565, %v564
    %v575 = vpack.c.b16 %v567, %v566
    %584 = vmatprep.subr.bf16.mxu0 0
    %585 = vmatpush1.bf16.msra.mxu0 %v575
    %586 = vmatprep.subr.bf16.mxu0 0
    %587 = vmatpush1.bf16.msra.mxu0 %v574
    %588 = vmatprep.subr.bf16.mxu0 0
    %589 = vmatpush1.bf16.msra.mxu0 %v573
    %590 = vmatprep.subr.bf16.mxu0 0
    %591 = vmatpush1.bf16.msra.mxu0 %v572
    %592 = vmatprep.subr.bf16.mxu0 0
    %593 = vmatpush1.bf16.msra.mxu0 %v571
    %594 = vmatprep.subr.bf16.mxu0 0
    %595 = vmatpush1.bf16.msra.mxu0 %v570
    %596 = vmatprep.subr.bf16.mxu0 0
    %597 = vmatpush1.bf16.msra.mxu0 %v569
    %598 = vmatprep.subr.bf16.mxu0 0
    %599 = vmatpush1.bf16.msra.mxu0 %v568
    %600 = vmatprep.subr.bf16.mxu0 0
    %601 = vmatpush2.bf16.msra.mxu0 0
    %602 = vmatprep.subr.bf16.mxu0 0
    %603 = vmatpush2.bf16.msra.mxu0 0
    %604 = vmatprep.subr.bf16.mxu0 0
    %605 = vmatpush2.bf16.msra.mxu0 0
    %606 = vmatprep.subr.bf16.mxu0 0
    %607 = vmatpush2.bf16.msra.mxu0 0
    %608 = vmatprep.subr.bf16.mxu0 0
    %609 = vmatpush2.bf16.msra.mxu0 0
    %610 = vmatprep.subr.bf16.mxu0 0
    %611 = vmatpush2.bf16.msra.mxu0 0
    %612 = vmatprep.subr.bf16.mxu0 0
    %613 = vmatpush2.bf16.msra.mxu0 0
    %614 = vmatprep.subr.bf16.mxu0 0
    %615 = vmatpush2.bf16.msra.mxu0 0
    %616 = vmatprep.mubr.bf16.mxu0 0
    %617 = vmatmul.mubr.bf16.gmra.mxu0 %v514
    %v618 = vpop.f32.mrf.mxu0
    %v619 = vadd.f32 %v535, %v618
    %v620 = vpop.f32.mrf.mxu0
    %v621 = vpop.f32.mrf.mxu0
    %v622 = vadd.f32 %v535, %v621
    %v623 = vpop.f32.mrf.mxu0
    %624 = vdwg.mxu0
    %625 = vst [vmem:[#allocation8] sm:$0xff] %v619
    %626 = vst [vmem:[#allocation8 + $0x8] sm:$0xff] %v622
    // Predicated region
    $region26: #{tpu_custom_call.1} parent=1 // pred_check
      _
    $region27: #{tpu_custom_call.1} parent=1 // pred_check_branch
      %628 = sbr.rel (0) target = $region29
    $region28: #{tpu_custom_call.1} parent=1 // pred_region
      %s630 = ssub.s32 256, 256
      %631 = vsyncadd [#allocation4], %s630
      %s632 = sshll.u32 [#allocation8], 4
      %s633 = int_to_ptr.vmem [resolvable:$true] %s632
      %638 = dma.vmem_to_hbm [thread:$0]  %s633, 256, %s3, [#allocation4], 128, 128, 8
    $region29: #{tpu_custom_call.1} parent=1 // pred_fallthru
      _
    // Predicated region
    $region30: #{tpu_custom_call.1} parent=1 // pred_check
      _
    $region31: #{tpu_custom_call.1} parent=1 // pred_check_branch
      %640 = sbr.rel (0) target = $region33
    $region32: #{tpu_custom_call.1} parent=1 // pred_region
      %641 = dma.done [#allocation4], 256
    $region33: #{tpu_custom_call.1} parent=1 // pred_fallthru
      _
    %642 = vsyncpa [#allocation3], 1
    %643 = vsyncpa [#allocation6], 1
    %644 = vsyncpa [#allocation4], 1

</llo_original>
